<compile_context>
chip_gen: v5e
topology: v5e:2x2
jax: 0.10.0
libtpu: 0.0.40
codegen_flags: <defaults>
</compile_context>

<pallas_src>
import functools

import jax
import jax.numpy as jnp
from jax import lax
from jax.experimental import pallas as pl
from jax.experimental.pallas import tpu as pltpu


def _dwsep_kernel(x_ref, mask_ref, wd_ref, wp_ref, o_ref, *,
                  shifts, n_batches, cin, cout):
    """Fused 3x3 depthwise + 1x1 pointwise + ReLU on lane-dense (N*Cin, H*W) activations.

    x_ref   : (N*Cin, HW)    activations, spatial flattened onto the lane axis
    mask_ref: (9, HW)        shared 'same'-padding border mask (1.0 valid / 0.0 pad) per tap
    wd_ref  : (N*Cin, 9)     depthwise 3x3 weights, one row per activation row
    wp_ref  : (Cout, Cin+1)  pointwise weights; last column = pointwise bias + wp @ dw_bias
    o_ref   : (N*Cout, HW)
    """
    x = x_ref[...]                                               # (N*Cin, HW), stays in vregs

    # 3x3 depthwise conv: 9 static cyclic lane-rolls (XLU) + masked select + per-row MAC (VPU).
    acc = None
    for t, s in enumerate(shifts):
        shifted = x if s == 0 else pltpu.roll(x, shift=s, axis=1)
        m = jnp.broadcast_to(mask_ref[t:t + 1, :], shifted.shape)    # f32 sublane broadcast
        term = wd_ref[:, t:t + 1] * jnp.where(m != 0.0, shifted, 0.0)
        acc = term if acc is None else acc + term

    # 1x1 pointwise conv as block-diagonal rank-1 VPU MACs per batch element, plus the folded
    # bias (last wp column) and ReLU.  Output stores are lane-dense (HW) and sublane-aligned.
    for n in range(n_batches):
        base = n * cin
        y = wp_ref[:, 0:1] * acc[base:base + 1, :]
        for ci in range(1, cin):
            y = y + wp_ref[:, ci:ci + 1] * acc[base + ci:base + ci + 1, :]
        y = y + wp_ref[:, cin:cin + 1]                           # folded (dw + pw) bias
        o_ref[n * cout:(n + 1) * cout, :] = jnp.maximum(y, 0.0).astype(o_ref.dtype)


def prepare_dwsep_params(wd_oihw, bd, wp_oihw, bp, *, batch, height, width):
    """One-time packing of weights / padding mask (parameter-load time, NOT the hot path)."""
    cin = wd_oihw.shape[0]
    cout = wp_oihw.shape[0]
    hw = height * width

    # 'same'-padding border mask per 3x3 tap, row-major (dy, dx) matching torch's kernel layout.
    hh = jnp.arange(height)
    ww = jnp.arange(width)
    rows = []
    for dy in (-1, 0, 1):
        mh = ((hh + dy >= 0) & (hh + dy < height)).astype(jnp.float32)
        for dx in (-1, 0, 1):
            mw = ((ww + dx >= 0) & (ww + dx < width)).astype(jnp.float32)
            rows.append(jnp.outer(mh, mw).reshape(hw))
    mask = jnp.stack(rows, axis=0)                                   # (9, HW)

    # Depthwise weights, one row per (n, c) activation row of the flattened layout.
    wd_flat = wd_oihw.reshape(cin, 9).astype(jnp.float32)            # (Cin, 9)
    wd_rows = jnp.tile(wd_flat, (batch, 1))                          # (N*Cin, 9)

    # Pointwise weights with both biases folded into an extra column
    # (exact: ReLU is applied after the pointwise conv).
    wp = wp_oihw.reshape(cout, cin).astype(jnp.float32)
    bp_eff = bp.astype(jnp.float32) + wp @ bd.astype(jnp.float32)
    wp_ext = jnp.concatenate([wp, bp_eff[:, None]], axis=1)          # (Cout, Cin+1)

    return {"mask": mask, "wd_rows": wd_rows, "wp_ext": wp_ext}


@jax.jit
def dwsep_apply(params, x_nchw):
    """F.relu(pointwise(depthwise(x))) for NCHW x, using the packed params."""
    N, Cin, H, W = x_nchw.shape
    HW = H * W
    NCin = N * Cin
    Cout = params["wp_ext"].shape[0]

    # Free reshape: spatial onto lanes, batch*channels onto sublanes. No pad / transpose / cast.
    x = x_nchw.reshape(NCin, HW).astype(jnp.float32)

    # Static cyclic-roll amounts per 3x3 tap: shifted[p] = x[(p + dy*W + dx) mod HW].
    shifts = tuple((-(dy * W + dx)) % HW for dy in (-1, 0, 1) for dx in (-1, 0, 1))

    kernel = functools.partial(_dwsep_kernel, shifts=shifts,
                               n_batches=N, cin=Cin, cout=Cout)

    out = pl.pallas_call(
        kernel,
        out_shape=jax.ShapeDtypeStruct((N * Cout, HW), jnp.float32),
        grid=(1,),                                   # collapsed batch grid: one step, whole problem
        in_specs=[
            pl.BlockSpec((NCin, HW), lambda i: (0, 0)),
            pl.BlockSpec((9, HW), lambda i: (0, 0)),
            pl.BlockSpec((NCin, 9), lambda i: (0, 0)),
            pl.BlockSpec((Cout, Cin + 1), lambda i: (0, 0)),
        ],
        out_specs=pl.BlockSpec((N * Cout, HW), lambda i: (0, 0)),
        compiler_params=pltpu.CompilerParams(
            dimension_semantics=("arbitrary",)),
    )(x, params["mask"], params["wd_rows"], params["wp_ext"])

    # TODO(synk): on v7x split into a 2-way "parallel" grid axis (N or H strips w/ 1-row halo) to
    #             engage both TensorCores; the collapsed single step is best on single-TC v5e/v6e.
    # TODO(synk): for real H/W/channel counts add an H-strip grid axis (>=512-lane blocks, per-chip
    #             vmem_limit_bytes), switch the pointwise to an MXU matmul for Cin/Cout >= 128,
    #             and use bf16 activations on v6e/v7x (keep f32 on v5e).
    return out.reshape(N, Cout, H, W)


def _reference(x_nchw, wd_oihw, bd, wp_oihw, bp):
    """Pure-JAX reference mirroring F.relu(pointwise(depthwise(x)))."""
    cin = x_nchw.shape[1]
    dn = ("NCHW", "OIHW", "NCHW")
    dw = lax.conv_general_dilated(x_nchw, wd_oihw, (1, 1), "SAME",
                                  feature_group_count=cin, dimension_numbers=dn)
    dw = dw + bd[None, :, None, None]
    pw = lax.conv_general_dilated(dw, wp_oihw, (1, 1), "SAME", dimension_numbers=dn)
    pw = pw + bp[None, :, None, None]
    return jnp.maximum(pw, 0.0)


if __name__ == "__main__":
    key = jax.random.PRNGKey(0)
    k_x, k_wd, k_bd, k_wp, k_bp = jax.random.split(key, 5)

    N, Cin, Cout, H, W = 2, 4, 8, 16, 16

    x = jax.random.normal(k_x, (N, Cin, H, W), dtype=jnp.float32)
    # Torch-layout parameters, deterministically initialized.
    wd_oihw = 0.2 * jax.random.normal(k_wd, (Cin, 1, 3, 3), dtype=jnp.float32)
    bd = 0.1 * jax.random.normal(k_bd, (Cin,), dtype=jnp.float32)
    wp_oihw = 0.2 * jax.random.normal(k_wp, (Cout, Cin, 1, 1), dtype=jnp.float32)
    bp = 0.1 * jax.random.normal(k_bp, (Cout,), dtype=jnp.float32)

    # One-time weight/mask packing (out of the hot path), then the fused kernel call.
    params = prepare_dwsep_params(wd_oihw, bd, wp_oihw, bp, batch=N, height=H, width=W)
    out = jax.block_until_ready(dwsep_apply(params, x))

    ref = jax.block_until_ready(_reference(x, wd_oihw, bd, wp_oihw, bp))
    assert out.shape == (N, Cout, H, W)
    assert jnp.allclose(out, ref, atol=1e-4, rtol=1e-4)

    print("KERNEL_OK")
</pallas_src>

<mosaic_0001>
module attributes {stable_mosaic.version = 11 : i64} {
  func.func @_dwsep_kernel(%arg0: i32, %arg1: memref<8x256xf32, #tpu.memory_space<vmem>>, %arg2: memref<9x256xf32, #tpu.memory_space<vmem>>, %arg3: memref<8x9xf32, #tpu.memory_space<vmem>>, %arg4: memref<8x5xf32, #tpu.memory_space<vmem>>, %arg5: memref<16x256xf32, #tpu.memory_space<vmem>>) attributes {dimension_semantics = [#tpu.dimension_semantics<arbitrary>], iteration_bounds = array<i64: 1>, scalar_prefetch = 0 : i64, scratch_operands = 0 : i64, tpu.core_type = #tpu.core_type<tc>, window_params = [{pipeline_mode = #tpu.pipeline_mode<synchronous>, transform_indices = @transform_0, window_bounds = array<i64: 8, 256>}, {pipeline_mode = #tpu.pipeline_mode<synchronous>, transform_indices = @transform_1, window_bounds = array<i64: 9, 256>}, {pipeline_mode = #tpu.pipeline_mode<synchronous>, transform_indices = @transform_2, window_bounds = array<i64: 8, 9>}, {pipeline_mode = #tpu.pipeline_mode<synchronous>, transform_indices = @transform_3, window_bounds = array<i64: 8, 5>}, {pipeline_mode = #tpu.pipeline_mode<synchronous>, transform_indices = @transform_4, window_bounds = array<i64: 16, 256>}]} {
    %c0 = arith.constant 0 : index
    %c0_0 = arith.constant 0 : index
    %0 = vector.load %arg1[%c0, %c0_0] : memref<8x256xf32, #tpu.memory_space<vmem>>, vector<8x256xf32>
    %c17_i32 = arith.constant 17 : i32
    %1 = tpu.dynamic_rotate %0 by %c17_i32 dim 1 : vector<8x256xf32>, i32 -> vector<8x256xf32>
    %c0_1 = arith.constant 0 : index
    %c0_2 = arith.constant 0 : index
    %2 = vector.load %arg2[%c0_1, %c0_2] : memref<9x256xf32, #tpu.memory_space<vmem>>, vector<1x256xf32>
    %3 = vector.shape_cast %2 : vector<1x256xf32> to vector<1x256xf32>
    %4 = vector.broadcast %3 : vector<1x256xf32> to vector<8x256xf32>
    %c0_3 = arith.constant 0 : index
    %c0_4 = arith.constant 0 : index
    %5 = vector.load %arg3[%c0_3, %c0_4] : memref<8x9xf32, #tpu.memory_space<vmem>>, vector<8x1xf32>
    %cst = arith.constant 0.000000e+00 : f32
    %6 = vector.broadcast %cst : f32 to vector<8x256xf32>
    %7 = arith.cmpf one, %4, %6 : vector<8x256xf32>
    %cst_5 = arith.constant 0.000000e+00 : f32
    %8 = vector.broadcast %cst_5 : f32 to vector<8x256xf32>
    %9 = arith.select %7, %1, %8 : vector<8x256xi1>, vector<8x256xf32>
    %10 = vector.broadcast %5 : vector<8x1xf32> to vector<8x256xf32>
    %11 = arith.mulf %10, %9 : vector<8x256xf32>
    %c16_i32 = arith.constant 16 : i32
    %12 = tpu.dynamic_rotate %0 by %c16_i32 dim 1 : vector<8x256xf32>, i32 -> vector<8x256xf32>
    %c1 = arith.constant 1 : index
    %c0_6 = arith.constant 0 : index
    %13 = vector.load %arg2[%c1, %c0_6] : memref<9x256xf32, #tpu.memory_space<vmem>>, vector<1x256xf32>
    %14 = vector.shape_cast %13 : vector<1x256xf32> to vector<1x256xf32>
    %15 = vector.broadcast %14 : vector<1x256xf32> to vector<8x256xf32>
    %c0_7 = arith.constant 0 : index
    %c1_8 = arith.constant 1 : index
    %16 = vector.load %arg3[%c0_7, %c1_8] : memref<8x9xf32, #tpu.memory_space<vmem>>, vector<8x1xf32>
    %cst_9 = arith.constant 0.000000e+00 : f32
    %17 = vector.broadcast %cst_9 : f32 to vector<8x256xf32>
    %18 = arith.cmpf one, %15, %17 : vector<8x256xf32>
    %cst_10 = arith.constant 0.000000e+00 : f32
    %19 = vector.broadcast %cst_10 : f32 to vector<8x256xf32>
    %20 = arith.select %18, %12, %19 : vector<8x256xi1>, vector<8x256xf32>
    %21 = vector.broadcast %16 : vector<8x1xf32> to vector<8x256xf32>
    %22 = arith.mulf %21, %20 : vector<8x256xf32>
    %23 = arith.addf %11, %22 : vector<8x256xf32>
    %c15_i32 = arith.constant 15 : i32
    %24 = tpu.dynamic_rotate %0 by %c15_i32 dim 1 : vector<8x256xf32>, i32 -> vector<8x256xf32>
    %c2 = arith.constant 2 : index
    %c0_11 = arith.constant 0 : index
    %25 = vector.load %arg2[%c2, %c0_11] : memref<9x256xf32, #tpu.memory_space<vmem>>, vector<1x256xf32>
    %26 = vector.shape_cast %25 : vector<1x256xf32> to vector<1x256xf32>
    %27 = vector.broadcast %26 : vector<1x256xf32> to vector<8x256xf32>
    %c0_12 = arith.constant 0 : index
    %c2_13 = arith.constant 2 : index
    %28 = vector.load %arg3[%c0_12, %c2_13] : memref<8x9xf32, #tpu.memory_space<vmem>>, vector<8x1xf32>
    %cst_14 = arith.constant 0.000000e+00 : f32
    %29 = vector.broadcast %cst_14 : f32 to vector<8x256xf32>
    %30 = arith.cmpf one, %27, %29 : vector<8x256xf32>
    %cst_15 = arith.constant 0.000000e+00 : f32
    %31 = vector.broadcast %cst_15 : f32 to vector<8x256xf32>
    %32 = arith.select %30, %24, %31 : vector<8x256xi1>, vector<8x256xf32>
    %33 = vector.broadcast %28 : vector<8x1xf32> to vector<8x256xf32>
    %34 = arith.mulf %33, %32 : vector<8x256xf32>
    %35 = arith.addf %23, %34 : vector<8x256xf32>
    %c1_i32 = arith.constant 1 : i32
    %36 = tpu.dynamic_rotate %0 by %c1_i32 dim 1 : vector<8x256xf32>, i32 -> vector<8x256xf32>
    %c3 = arith.constant 3 : index
    %c0_16 = arith.constant 0 : index
    %37 = vector.load %arg2[%c3, %c0_16] : memref<9x256xf32, #tpu.memory_space<vmem>>, vector<1x256xf32>
    %38 = vector.shape_cast %37 : vector<1x256xf32> to vector<1x256xf32>
    %39 = vector.broadcast %38 : vector<1x256xf32> to vector<8x256xf32>
    %c0_17 = arith.constant 0 : index
    %c3_18 = arith.constant 3 : index
    %40 = vector.load %arg3[%c0_17, %c3_18] : memref<8x9xf32, #tpu.memory_space<vmem>>, vector<8x1xf32>
    %cst_19 = arith.constant 0.000000e+00 : f32
    %41 = vector.broadcast %cst_19 : f32 to vector<8x256xf32>
    %42 = arith.cmpf one, %39, %41 : vector<8x256xf32>
    %cst_20 = arith.constant 0.000000e+00 : f32
    %43 = vector.broadcast %cst_20 : f32 to vector<8x256xf32>
    %44 = arith.select %42, %36, %43 : vector<8x256xi1>, vector<8x256xf32>
    %45 = vector.broadcast %40 : vector<8x1xf32> to vector<8x256xf32>
    %46 = arith.mulf %45, %44 : vector<8x256xf32>
    %47 = arith.addf %35, %46 : vector<8x256xf32>
    %c4 = arith.constant 4 : index
    %c0_21 = arith.constant 0 : index
    %48 = vector.load %arg2[%c4, %c0_21] : memref<9x256xf32, #tpu.memory_space<vmem>>, vector<1x256xf32>
    %49 = vector.shape_cast %48 : vector<1x256xf32> to vector<1x256xf32>
    %50 = vector.broadcast %49 : vector<1x256xf32> to vector<8x256xf32>
    %c0_22 = arith.constant 0 : index
    %c4_23 = arith.constant 4 : index
    %51 = vector.load %arg3[%c0_22, %c4_23] : memref<8x9xf32, #tpu.memory_space<vmem>>, vector<8x1xf32>
    %cst_24 = arith.constant 0.000000e+00 : f32
    %52 = vector.broadcast %cst_24 : f32 to vector<8x256xf32>
    %53 = arith.cmpf one, %50, %52 : vector<8x256xf32>
    %cst_25 = arith.constant 0.000000e+00 : f32
    %54 = vector.broadcast %cst_25 : f32 to vector<8x256xf32>
    %55 = arith.select %53, %0, %54 : vector<8x256xi1>, vector<8x256xf32>
    %56 = vector.broadcast %51 : vector<8x1xf32> to vector<8x256xf32>
    %57 = arith.mulf %56, %55 : vector<8x256xf32>
    %58 = arith.addf %47, %57 : vector<8x256xf32>
    %c255_i32 = arith.constant 255 : i32
    %59 = tpu.dynamic_rotate %0 by %c255_i32 dim 1 : vector<8x256xf32>, i32 -> vector<8x256xf32>
    %c5 = arith.constant 5 : index
    %c0_26 = arith.constant 0 : index
    %60 = vector.load %arg2[%c5, %c0_26] : memref<9x256xf32, #tpu.memory_space<vmem>>, vector<1x256xf32>
    %61 = vector.shape_cast %60 : vector<1x256xf32> to vector<1x256xf32>
    %62 = vector.broadcast %61 : vector<1x256xf32> to vector<8x256xf32>
    %c0_27 = arith.constant 0 : index
    %c5_28 = arith.constant 5 : index
    %63 = vector.load %arg3[%c0_27, %c5_28] : memref<8x9xf32, #tpu.memory_space<vmem>>, vector<8x1xf32>
    %cst_29 = arith.constant 0.000000e+00 : f32
    %64 = vector.broadcast %cst_29 : f32 to vector<8x256xf32>
    %65 = arith.cmpf one, %62, %64 : vector<8x256xf32>
    %cst_30 = arith.constant 0.000000e+00 : f32
    %66 = vector.broadcast %cst_30 : f32 to vector<8x256xf32>
    %67 = arith.select %65, %59, %66 : vector<8x256xi1>, vector<8x256xf32>
    %68 = vector.broadcast %63 : vector<8x1xf32> to vector<8x256xf32>
    %69 = arith.mulf %68, %67 : vector<8x256xf32>
    %70 = arith.addf %58, %69 : vector<8x256xf32>
    %c241_i32 = arith.constant 241 : i32
    %71 = tpu.dynamic_rotate %0 by %c241_i32 dim 1 : vector<8x256xf32>, i32 -> vector<8x256xf32>
    %c6 = arith.constant 6 : index
    %c0_31 = arith.constant 0 : index
    %72 = vector.load %arg2[%c6, %c0_31] : memref<9x256xf32, #tpu.memory_space<vmem>>, vector<1x256xf32>
    %73 = vector.shape_cast %72 : vector<1x256xf32> to vector<1x256xf32>
    %74 = vector.broadcast %73 : vector<1x256xf32> to vector<8x256xf32>
    %c0_32 = arith.constant 0 : index
    %c6_33 = arith.constant 6 : index
    %75 = vector.load %arg3[%c0_32, %c6_33] : memref<8x9xf32, #tpu.memory_space<vmem>>, vector<8x1xf32>
    %cst_34 = arith.constant 0.000000e+00 : f32
    %76 = vector.broadcast %cst_34 : f32 to vector<8x256xf32>
    %77 = arith.cmpf one, %74, %76 : vector<8x256xf32>
    %cst_35 = arith.constant 0.000000e+00 : f32
    %78 = vector.broadcast %cst_35 : f32 to vector<8x256xf32>
    %79 = arith.select %77, %71, %78 : vector<8x256xi1>, vector<8x256xf32>
    %80 = vector.broadcast %75 : vector<8x1xf32> to vector<8x256xf32>
    %81 = arith.mulf %80, %79 : vector<8x256xf32>
    %82 = arith.addf %70, %81 : vector<8x256xf32>
    %c240_i32 = arith.constant 240 : i32
    %83 = tpu.dynamic_rotate %0 by %c240_i32 dim 1 : vector<8x256xf32>, i32 -> vector<8x256xf32>
    %c7 = arith.constant 7 : index
    %c0_36 = arith.constant 0 : index
    %84 = vector.load %arg2[%c7, %c0_36] : memref<9x256xf32, #tpu.memory_space<vmem>>, vector<1x256xf32>
    %85 = vector.shape_cast %84 : vector<1x256xf32> to vector<1x256xf32>
    %86 = vector.broadcast %85 : vector<1x256xf32> to vector<8x256xf32>
    %c0_37 = arith.constant 0 : index
    %c7_38 = arith.constant 7 : index
    %87 = vector.load %arg3[%c0_37, %c7_38] : memref<8x9xf32, #tpu.memory_space<vmem>>, vector<8x1xf32>
    %cst_39 = arith.constant 0.000000e+00 : f32
    %88 = vector.broadcast %cst_39 : f32 to vector<8x256xf32>
    %89 = arith.cmpf one, %86, %88 : vector<8x256xf32>
    %cst_40 = arith.constant 0.000000e+00 : f32
    %90 = vector.broadcast %cst_40 : f32 to vector<8x256xf32>
    %91 = arith.select %89, %83, %90 : vector<8x256xi1>, vector<8x256xf32>
    %92 = vector.broadcast %87 : vector<8x1xf32> to vector<8x256xf32>
    %93 = arith.mulf %92, %91 : vector<8x256xf32>
    %94 = arith.addf %82, %93 : vector<8x256xf32>
    %c239_i32 = arith.constant 239 : i32
    %95 = tpu.dynamic_rotate %0 by %c239_i32 dim 1 : vector<8x256xf32>, i32 -> vector<8x256xf32>
    %c8 = arith.constant 8 : index
    %c0_41 = arith.constant 0 : index
    %96 = vector.load %arg2[%c8, %c0_41] : memref<9x256xf32, #tpu.memory_space<vmem>>, vector<1x256xf32>
    %97 = vector.shape_cast %96 : vector<1x256xf32> to vector<1x256xf32>
    %98 = vector.broadcast %97 : vector<1x256xf32> to vector<8x256xf32>
    %c0_42 = arith.constant 0 : index
    %c8_43 = arith.constant 8 : index
    %99 = vector.load %arg3[%c0_42, %c8_43] : memref<8x9xf32, #tpu.memory_space<vmem>>, vector<8x1xf32>
    %cst_44 = arith.constant 0.000000e+00 : f32
    %100 = vector.broadcast %cst_44 : f32 to vector<8x256xf32>
    %101 = arith.cmpf one, %98, %100 : vector<8x256xf32>
    %cst_45 = arith.constant 0.000000e+00 : f32
    %102 = vector.broadcast %cst_45 : f32 to vector<8x256xf32>
    %103 = arith.select %101, %95, %102 : vector<8x256xi1>, vector<8x256xf32>
    %104 = vector.broadcast %99 : vector<8x1xf32> to vector<8x256xf32>
    %105 = arith.mulf %104, %103 : vector<8x256xf32>
    %106 = arith.addf %94, %105 : vector<8x256xf32>
    %c0_46 = arith.constant 0 : index
    %c0_47 = arith.constant 0 : index
    %107 = vector.load %arg4[%c0_46, %c0_47] : memref<8x5xf32, #tpu.memory_space<vmem>>, vector<8x1xf32>
    %108 = vector.extract_strided_slice %106 {offsets = [0, 0], sizes = [1, 256], strides = [1, 1]} : vector<8x256xf32> to vector<1x256xf32>
    %109 = vector.broadcast %107 : vector<8x1xf32> to vector<8x256xf32>
    %110 = vector.broadcast %108 : vector<1x256xf32> to vector<8x256xf32>
    %111 = arith.mulf %109, %110 : vector<8x256xf32>
    %c0_48 = arith.constant 0 : index
    %c1_49 = arith.constant 1 : index
    %112 = vector.load %arg4[%c0_48, %c1_49] : memref<8x5xf32, #tpu.memory_space<vmem>>, vector<8x1xf32>
    %113 = vector.extract_strided_slice %106 {offsets = [1, 0], sizes = [1, 256], strides = [1, 1]} : vector<8x256xf32> to vector<1x256xf32>
    %114 = vector.broadcast %112 : vector<8x1xf32> to vector<8x256xf32>
    %115 = vector.broadcast %113 : vector<1x256xf32> to vector<8x256xf32>
    %116 = arith.mulf %114, %115 : vector<8x256xf32>
    %117 = arith.addf %111, %116 : vector<8x256xf32>
    %c0_50 = arith.constant 0 : index
    %c2_51 = arith.constant 2 : index
    %118 = vector.load %arg4[%c0_50, %c2_51] : memref<8x5xf32, #tpu.memory_space<vmem>>, vector<8x1xf32>
    %119 = vector.extract_strided_slice %106 {offsets = [2, 0], sizes = [1, 256], strides = [1, 1]} : vector<8x256xf32> to vector<1x256xf32>
    %120 = vector.broadcast %118 : vector<8x1xf32> to vector<8x256xf32>
    %121 = vector.broadcast %119 : vector<1x256xf32> to vector<8x256xf32>
    %122 = arith.mulf %120, %121 : vector<8x256xf32>
    %123 = arith.addf %117, %122 : vector<8x256xf32>
    %c0_52 = arith.constant 0 : index
    %c3_53 = arith.constant 3 : index
    %124 = vector.load %arg4[%c0_52, %c3_53] : memref<8x5xf32, #tpu.memory_space<vmem>>, vector<8x1xf32>
    %125 = vector.extract_strided_slice %106 {offsets = [3, 0], sizes = [1, 256], strides = [1, 1]} : vector<8x256xf32> to vector<1x256xf32>
    %126 = vector.broadcast %124 : vector<8x1xf32> to vector<8x256xf32>
    %127 = vector.broadcast %125 : vector<1x256xf32> to vector<8x256xf32>
    %128 = arith.mulf %126, %127 : vector<8x256xf32>
    %129 = arith.addf %123, %128 : vector<8x256xf32>
    %c0_54 = arith.constant 0 : index
    %c4_55 = arith.constant 4 : index
    %130 = vector.load %arg4[%c0_54, %c4_55] : memref<8x5xf32, #tpu.memory_space<vmem>>, vector<8x1xf32>
    %131 = vector.broadcast %130 : vector<8x1xf32> to vector<8x256xf32>
    %132 = arith.addf %129, %131 : vector<8x256xf32>
    %cst_56 = arith.constant 0.000000e+00 : f32
    %133 = vector.broadcast %cst_56 : f32 to vector<8x256xf32>
    %134 = arith.maximumf %132, %133 : vector<8x256xf32>
    %c0_57 = arith.constant 0 : index
    %c0_58 = arith.constant 0 : index
    %135 = vector.load %arg5[%c0_57, %c0_58] : memref<16x256xf32, #tpu.memory_space<vmem>>, vector<8x256xf32>
    tpu.vector_store %arg5[%c0_57, %c0_58], %134 {strides = array<i32>} : memref<16x256xf32, #tpu.memory_space<vmem>>, vector<8x256xf32>,
    %c0_59 = arith.constant 0 : index
    %c0_60 = arith.constant 0 : index
    %136 = vector.load %arg4[%c0_59, %c0_60] : memref<8x5xf32, #tpu.memory_space<vmem>>, vector<8x1xf32>
    %137 = vector.extract_strided_slice %106 {offsets = [4, 0], sizes = [1, 256], strides = [1, 1]} : vector<8x256xf32> to vector<1x256xf32>
    %138 = vector.broadcast %136 : vector<8x1xf32> to vector<8x256xf32>
    %139 = vector.broadcast %137 : vector<1x256xf32> to vector<8x256xf32>
    %140 = arith.mulf %138, %139 : vector<8x256xf32>
    %c0_61 = arith.constant 0 : index
    %c1_62 = arith.constant 1 : index
    %141 = vector.load %arg4[%c0_61, %c1_62] : memref<8x5xf32, #tpu.memory_space<vmem>>, vector<8x1xf32>
    %142 = vector.extract_strided_slice %106 {offsets = [5, 0], sizes = [1, 256], strides = [1, 1]} : vector<8x256xf32> to vector<1x256xf32>
    %143 = vector.broadcast %141 : vector<8x1xf32> to vector<8x256xf32>
    %144 = vector.broadcast %142 : vector<1x256xf32> to vector<8x256xf32>
    %145 = arith.mulf %143, %144 : vector<8x256xf32>
    %146 = arith.addf %140, %145 : vector<8x256xf32>
    %c0_63 = arith.constant 0 : index
    %c2_64 = arith.constant 2 : index
    %147 = vector.load %arg4[%c0_63, %c2_64] : memref<8x5xf32, #tpu.memory_space<vmem>>, vector<8x1xf32>
    %148 = vector.extract_strided_slice %106 {offsets = [6, 0], sizes = [1, 256], strides = [1, 1]} : vector<8x256xf32> to vector<1x256xf32>
    %149 = vector.broadcast %147 : vector<8x1xf32> to vector<8x256xf32>
    %150 = vector.broadcast %148 : vector<1x256xf32> to vector<8x256xf32>
    %151 = arith.mulf %149, %150 : vector<8x256xf32>
    %152 = arith.addf %146, %151 : vector<8x256xf32>
    %c0_65 = arith.constant 0 : index
    %c3_66 = arith.constant 3 : index
    %153 = vector.load %arg4[%c0_65, %c3_66] : memref<8x5xf32, #tpu.memory_space<vmem>>, vector<8x1xf32>
    %154 = vector.extract_strided_slice %106 {offsets = [7, 0], sizes = [1, 256], strides = [1, 1]} : vector<8x256xf32> to vector<1x256xf32>
    %155 = vector.broadcast %153 : vector<8x1xf32> to vector<8x256xf32>
    %156 = vector.broadcast %154 : vector<1x256xf32> to vector<8x256xf32>
    %157 = arith.mulf %155, %156 : vector<8x256xf32>
    %158 = arith.addf %152, %157 : vector<8x256xf32>
    %c0_67 = arith.constant 0 : index
    %c4_68 = arith.constant 4 : index
    %159 = vector.load %arg4[%c0_67, %c4_68] : memref<8x5xf32, #tpu.memory_space<vmem>>, vector<8x1xf32>
    %160 = vector.broadcast %159 : vector<8x1xf32> to vector<8x256xf32>
    %161 = arith.addf %158, %160 : vector<8x256xf32>
    %cst_69 = arith.constant 0.000000e+00 : f32
    %162 = vector.broadcast %cst_69 : f32 to vector<8x256xf32>
    %163 = arith.maximumf %161, %162 : vector<8x256xf32>
    %c8_70 = arith.constant 8 : index
    %c0_71 = arith.constant 0 : index
    %164 = vector.load %arg5[%c8_70, %c0_71] : memref<16x256xf32, #tpu.memory_space<vmem>>, vector<8x256xf32>
    tpu.vector_store %arg5[%c8_70, %c0_71], %163 {strides = array<i32>} : memref<16x256xf32, #tpu.memory_space<vmem>>, vector<8x256xf32>,
    return
  }
  func.func @transform_0(%arg0: i32) -> (i32, i32) {
    %c0_i32 = arith.constant 0 : i32
    %c0_i32_0 = arith.constant 0 : i32
    %c0_i32_1 = arith.constant 0 : i32
    return %c0_i32, %c0_i32_0 : i32, i32
  }
  func.func @transform_1(%arg0: i32) -> (i32, i32) {
    %c0_i32 = arith.constant 0 : i32
    %c0_i32_0 = arith.constant 0 : i32
    %c0_i32_1 = arith.constant 0 : i32
    return %c0_i32, %c0_i32_0 : i32, i32
  }
  func.func @transform_2(%arg0: i32) -> (i32, i32) {
    %c0_i32 = arith.constant 0 : i32
    %c0_i32_0 = arith.constant 0 : i32
    %c0_i32_1 = arith.constant 0 : i32
    return %c0_i32, %c0_i32_0 : i32, i32
  }
  func.func @transform_3(%arg0: i32) -> (i32, i32) {
    %c0_i32 = arith.constant 0 : i32
    %c0_i32_0 = arith.constant 0 : i32
    %c0_i32_1 = arith.constant 0 : i32
    return %c0_i32, %c0_i32_0 : i32, i32
  }
  func.func @transform_4(%arg0: i32) -> (i32, i32) {
    %c0_i32 = arith.constant 0 : i32
    %c0_i32_0 = arith.constant 0 : i32
    %c0_i32_1 = arith.constant 0 : i32
    return %c0_i32, %c0_i32_0 : i32, i32
  }
}

</mosaic_0001>

<llo_original>
// kernel: dwsep_apply.1
$region0: #{dwsep_apply.1}
  #allocation0 [shape = 'u32[]', space=smem, size = 0x4, offset = 0x4, fixed_abs, tag = 'smem constant byte address 0x4 - core index']
  #allocation1 [shape = 'u32[72,128]{1,0:T(1,128)}', space=vmem, size = 0x9000, scoped, tag = 'internal scratch']
  %s0 = inlined_call_operand.vmem [shape: f32[8,256], index: 0, kind: input, shape index: {}]
  %s1 = inlined_call_operand.vmem [shape: f32[9,256], index: 1, kind: input, shape index: {}]
  %s2 = inlined_call_operand.vmem [shape: f32[8,9], index: 2, kind: input, shape index: {}]
  %s3 = inlined_call_operand.vmem [shape: f32[8,5], index: 3, kind: input, shape index: {}]
  %s4 = inlined_call_operand.vmem [shape: f32[16,256], index: 4, kind: output, shape index: {}]
  %s5 = sld [smem:[#allocation0]]
  $region26: #{dwsep_apply.1} parent=0
    _
  %s7 = ssub.s32 1, %s5
  %s8 = scalar_select 0, %s7, %s5
  // Predicated region
  $region2: #{dwsep_apply.1} parent=0 // pred_check
    _
  $region3: #{dwsep_apply.1} parent=0 // pred_check_branch
    %10 = sbr.rel (0) target = $region5
  $region4: #{dwsep_apply.1} parent=0 // pred_region
    _
  $region5: #{dwsep_apply.1} parent=0 // pred_fallthru
    _
  // Predicated region
  $region6: #{dwsep_apply.1} parent=0 // pred_check
    _
  $region7: #{dwsep_apply.1} parent=0 // pred_check_branch
    %12 = sbr.rel (0) target = $region9
  $region8: #{dwsep_apply.1} parent=0 // pred_region
    _
  $region9: #{dwsep_apply.1} parent=0 // pred_fallthru
    _
  // Predicated region
  $region10: #{dwsep_apply.1} parent=0 // pred_check
    _
  $region11: #{dwsep_apply.1} parent=0 // pred_check_branch
    %14 = sbr.rel (0) target = $region13
  $region12: #{dwsep_apply.1} parent=0 // pred_region
    _
  $region13: #{dwsep_apply.1} parent=0 // pred_fallthru
    _
  // Predicated region
  $region14: #{dwsep_apply.1} parent=0 // pred_check
    _
  $region15: #{dwsep_apply.1} parent=0 // pred_check_branch
    %16 = sbr.rel (0) target = $region17
  $region16: #{dwsep_apply.1} parent=0 // pred_region
    _
  $region17: #{dwsep_apply.1} parent=0 // pred_fallthru
    _
  %v17 = vld [vmem:[%s0] sm:$0xff]
  %v18 = vld [vmem:[%s0 + $0x8] sm:$0xff]
  %19 = vrot.lane.b32.xlu0 %v17, 17
  %v20 = vpop.permute.xlu0 %19
  %21 = vrot.lane.b32.xlu0 %v18, 17
  %v22 = vpop.permute.xlu0 %21
  %v23 = vlaneseq
  %v24 = vand.u32 %v23, 127
  %vm25 = vcmp.lt.s32.totalorder %v24, 17
  %v26 = vsel %vm25, %v20, %v22
  %v27 = vsel %vm25, %v22, %v20
  %v28 = vld [vmem:[%s1] ss:$8 sm:$0x3]
  %v30 = vperm.slane %v28, 0
  %v31 = vperm.slane %v28, 1
  %v34 = vld [vmem:[%s2] sm:$0xff]
  %vm35 = vcmp.ne.f32.partialorder %v30, 0.0
  %vm36 = vcmp.ne.f32.partialorder %v31, 0.0
  %v37 = vsel %vm35, %v27, 0.0
  %v38 = vsel %vm36, %v26, 0.0
  %40 = vset.pattern.permute.xlu0 0
  %41 = vperm.xlu0 %40, %v34
  %v42 = vpop.permute.xlu0 %41
  %v44 = vmul.f32 %v42, %v37
  %v45 = vmul.f32 %v42, %v38
  %46 = vrot.lane.b32.xlu0 %v17, 16
  %v47 = vpop.permute.xlu0 %46
  %48 = vrot.lane.b32.xlu0 %v18, 16
  %v49 = vpop.permute.xlu0 %48
  %vm50 = vcmp.lt.s32.totalorder %v24, 16
  %v51 = vsel %vm50, %v47, %v49
  %v52 = vsel %vm50, %v49, %v47
  %s53 = scalar_lea.vmem %s1, 1
  %v54 = vld [vmem:[%s53] ss:$8 sm:$0x3]
  %v56 = vperm.slane %v54, 0
  %v57 = vperm.slane %v54, 1
  %vm60 = vcmp.ne.f32.partialorder %v56, 0.0
  %vm61 = vcmp.ne.f32.partialorder %v57, 0.0
  %v62 = vsel %vm60, %v52, 0.0
  %v63 = vsel %vm61, %v51, 0.0
  %64 = vset.pattern.permute.xlu0 1
  %65 = vperm.xlu0 %64, %v34
  %v66 = vpop.permute.xlu0 %65
  %v68 = vmul.f32 %v66, %v62
  %v69 = vmul.f32 %v66, %v63
  %v70 = vadd.f32 %v44, %v68
  %v71 = vadd.f32 %v45, %v69
  %72 = vrot.lane.b32.xlu0 %v17, 15
  %v73 = vpop.permute.xlu0 %72
  %74 = vrot.lane.b32.xlu0 %v18, 15
  %v75 = vpop.permute.xlu0 %74
  %vm76 = vcmp.lt.s32.totalorder %v24, 15
  %v77 = vsel %vm76, %v73, %v75
  %v78 = vsel %vm76, %v75, %v73
  %s79 = scalar_lea.vmem %s1, 2
  %v80 = vld [vmem:[%s79] ss:$8 sm:$0x3]
  %v82 = vperm.slane %v80, 0
  %v83 = vperm.slane %v80, 1
  %vm86 = vcmp.ne.f32.partialorder %v82, 0.0
  %vm87 = vcmp.ne.f32.partialorder %v83, 0.0
  %v88 = vsel %vm86, %v78, 0.0
  %v89 = vsel %vm87, %v77, 0.0
  %90 = vset.pattern.permute.xlu0 2
  %91 = vperm.xlu0 %90, %v34
  %v92 = vpop.permute.xlu0 %91
  %v94 = vmul.f32 %v92, %v88
  %v95 = vmul.f32 %v92, %v89
  %v96 = vadd.f32 %v70, %v94
  %v97 = vadd.f32 %v71, %v95
  %98 = vrot.lane.b32.xlu0 %v17, 1
  %v99 = vpop.permute.xlu0 %98
  %100 = vrot.lane.b32.xlu0 %v18, 1
  %v101 = vpop.permute.xlu0 %100
  %vm102 = vcmp.lt.s32.totalorder %v24, 1
  %v103 = vsel %vm102, %v99, %v101
  %v104 = vsel %vm102, %v101, %v99
  %s105 = scalar_lea.vmem %s1, 3
  %v106 = vld [vmem:[%s105] ss:$8 sm:$0x3]
  %v108 = vperm.slane %v106, 0
  %v109 = vperm.slane %v106, 1
  %vm112 = vcmp.ne.f32.partialorder %v108, 0.0
  %vm113 = vcmp.ne.f32.partialorder %v109, 0.0
  %v114 = vsel %vm112, %v104, 0.0
  %v115 = vsel %vm113, %v103, 0.0
  %116 = vset.pattern.permute.xlu0 3
  %117 = vperm.xlu0 %116, %v34
  %v118 = vpop.permute.xlu0 %117
  %v120 = vmul.f32 %v118, %v114
  %v121 = vmul.f32 %v118, %v115
  %v122 = vadd.f32 %v96, %v120
  %v123 = vadd.f32 %v97, %v121
  %s124 = scalar_lea.vmem %s1, 4
  %v125 = vld [vmem:[%s124] ss:$8 sm:$0x3]
  %v127 = vperm.slane %v125, 0
  %v128 = vperm.slane %v125, 1
  %vm131 = vcmp.ne.f32.partialorder %v127, 0.0
  %vm132 = vcmp.ne.f32.partialorder %v128, 0.0
  %v133 = vsel %vm131, %v17, 0.0
  %v134 = vsel %vm132, %v18, 0.0
  %135 = vset.pattern.permute.xlu0 4
  %136 = vperm.xlu0 %135, %v34
  %v137 = vpop.permute.xlu0 %136
  %v139 = vmul.f32 %v137, %v133
  %v140 = vmul.f32 %v137, %v134
  %v141 = vadd.f32 %v122, %v139
  %v142 = vadd.f32 %v123, %v140
  %143 = vrot.lane.b32.xlu0 %v17, 127
  %v144 = vpop.permute.xlu0 %143
  %145 = vrot.lane.b32.xlu0 %v18, 127
  %v146 = vpop.permute.xlu0 %145
  %vm147 = vcmp.lt.s32.totalorder %v24, 127
  %v148 = vsel %vm147, %v144, %v146
  %v149 = vsel %vm147, %v146, %v144
  %s150 = scalar_lea.vmem %s1, 5
  %v151 = vld [vmem:[%s150] ss:$8 sm:$0x3]
  %v153 = vperm.slane %v151, 0
  %v154 = vperm.slane %v151, 1
  %vm157 = vcmp.ne.f32.partialorder %v153, 0.0
  %vm158 = vcmp.ne.f32.partialorder %v154, 0.0
  %v159 = vsel %vm157, %v148, 0.0
  %v160 = vsel %vm158, %v149, 0.0
  %161 = vset.pattern.permute.xlu0 5
  %162 = vperm.xlu0 %161, %v34
  %v163 = vpop.permute.xlu0 %162
  %v165 = vmul.f32 %v163, %v159
  %v166 = vmul.f32 %v163, %v160
  %v167 = vadd.f32 %v141, %v165
  %v168 = vadd.f32 %v142, %v166
  %169 = vrot.lane.b32.xlu0 %v17, 113
  %v170 = vpop.permute.xlu0 %169
  %171 = vrot.lane.b32.xlu0 %v18, 113
  %v172 = vpop.permute.xlu0 %171
  %vm173 = vcmp.lt.s32.totalorder %v24, 113
  %v174 = vsel %vm173, %v170, %v172
  %v175 = vsel %vm173, %v172, %v170
  %s176 = scalar_lea.vmem %s1, 6
  %v177 = vld [vmem:[%s176] ss:$8 sm:$0x3]
  %v179 = vperm.slane %v177, 0
  %v180 = vperm.slane %v177, 1
  %vm183 = vcmp.ne.f32.partialorder %v179, 0.0
  %vm184 = vcmp.ne.f32.partialorder %v180, 0.0
  %v185 = vsel %vm183, %v174, 0.0
  %v186 = vsel %vm184, %v175, 0.0
  %187 = vset.pattern.permute.xlu0 6
  %188 = vperm.xlu0 %187, %v34
  %v189 = vpop.permute.xlu0 %188
  %v191 = vmul.f32 %v189, %v185
  %v192 = vmul.f32 %v189, %v186
  %v193 = vadd.f32 %v167, %v191
  %v194 = vadd.f32 %v168, %v192
  %195 = vrot.lane.b32.xlu0 %v17, 112
  %v196 = vpop.permute.xlu0 %195
  %197 = vrot.lane.b32.xlu0 %v18, 112
  %v198 = vpop.permute.xlu0 %197
  %vm199 = vcmp.lt.s32.totalorder %v24, 112
  %v200 = vsel %vm199, %v196, %v198
  %v201 = vsel %vm199, %v198, %v196
  %s202 = scalar_lea.vmem %s1, 7
  %v203 = vld [vmem:[%s202] ss:$8 sm:$0x3]
  %v205 = vperm.slane %v203, 0
  %v206 = vperm.slane %v203, 1
  %vm209 = vcmp.ne.f32.partialorder %v205, 0.0
  %vm210 = vcmp.ne.f32.partialorder %v206, 0.0
  %v211 = vsel %vm209, %v200, 0.0
  %v212 = vsel %vm210, %v201, 0.0
  %213 = vset.pattern.permute.xlu0 7
  %214 = vperm.xlu0 %213, %v34
  %v215 = vpop.permute.xlu0 %214
  %v217 = vmul.f32 %v215, %v211
  %v218 = vmul.f32 %v215, %v212
  %v219 = vadd.f32 %v193, %v217
  %v220 = vadd.f32 %v194, %v218
  %221 = vrot.lane.b32.xlu0 %v17, 111
  %v222 = vpop.permute.xlu0 %221
  %223 = vrot.lane.b32.xlu0 %v18, 111
  %v224 = vpop.permute.xlu0 %223
  %vm225 = vcmp.lt.s32.totalorder %v24, 111
  %v226 = vsel %vm225, %v222, %v224
  %v227 = vsel %vm225, %v224, %v222
  %s228 = scalar_lea.vmem %s1, 16
  %v229 = vld [vmem:[%s228] ss:$8 sm:$0x3]
  %v231 = vperm.slane %v229, 0
  %v232 = vperm.slane %v229, 1
  %vm235 = vcmp.ne.f32.partialorder %v231, 0.0
  %vm236 = vcmp.ne.f32.partialorder %v232, 0.0
  %v237 = vsel %vm235, %v226, 0.0
  %v238 = vsel %vm236, %v227, 0.0
  %239 = vset.pattern.permute.xlu0 8
  %240 = vperm.xlu0 %239, %v34
  %v241 = vpop.permute.xlu0 %240
  %v243 = vmul.f32 %v241, %v237
  %v244 = vmul.f32 %v241, %v238
  %v245 = vadd.f32 %v219, %v243
  %v246 = vadd.f32 %v220, %v244
  %v247 = vld [vmem:[%s3] sm:$0xff]
  %249 = vset.pattern.permute.xlu0 0
  %250 = vperm.xlu0 %249, %v247
  %v251 = vpop.permute.xlu0 %250
  %v253 = vperm.slane %v245, 0
  %v254 = vperm.slane %v246, 0
  %v255 = vmul.f32 %v251, %v253
  %v256 = vmul.f32 %v251, %v254
  %257 = vset.pattern.permute.xlu0 1
  %258 = vperm.xlu0 %257, %v247
  %v259 = vpop.permute.xlu0 %258
  %v261 = vperm.slane %v245, 1
  %v262 = vperm.slane %v246, 1
  %v263 = vmul.f32 %v259, %v261
  %v264 = vmul.f32 %v259, %v262
  %v265 = vadd.f32 %v255, %v263
  %v266 = vadd.f32 %v256, %v264
  %267 = vset.pattern.permute.xlu0 2
  %268 = vperm.xlu0 %267, %v247
  %v269 = vpop.permute.xlu0 %268
  %v271 = vperm.slane %v245, 2
  %v272 = vperm.slane %v246, 2
  %v273 = vmul.f32 %v269, %v271
  %v274 = vmul.f32 %v269, %v272
  %v275 = vadd.f32 %v265, %v273
  %v276 = vadd.f32 %v266, %v274
  %277 = vset.pattern.permute.xlu0 3
  %278 = vperm.xlu0 %277, %v247
  %v279 = vpop.permute.xlu0 %278
  %v281 = vperm.slane %v245, 3
  %v282 = vperm.slane %v246, 3
  %v283 = vmul.f32 %v279, %v281
  %v284 = vmul.f32 %v279, %v282
  %v285 = vadd.f32 %v275, %v283
  %v286 = vadd.f32 %v276, %v284
  %287 = vset.pattern.permute.xlu0 4
  %288 = vperm.xlu0 %287, %v247
  %v289 = vpop.permute.xlu0 %288
  %v291 = vadd.f32 %v285, %v289
  %v292 = vadd.f32 %v286, %v289
  %v293 = vmax.f32 %v291, 0.0
  %v294 = vmax.f32 %v292, 0.0
  %295 = vst [vmem:[%s4] sm:$0xff] %v293
  %296 = vst [vmem:[%s4 + $0x8] sm:$0xff] %v294
  %v297 = vld [vmem:[%s3] sm:$0xff]
  %299 = vset.pattern.permute.xlu0 0
  %300 = vperm.xlu0 %299, %v297
  %v301 = vpop.permute.xlu0 %300
  %v303 = vperm.slane %v245, 4
  %v304 = vperm.slane %v246, 4
  %v305 = vmul.f32 %v301, %v303
  %v306 = vmul.f32 %v301, %v304
  %307 = vset.pattern.permute.xlu0 1
  %308 = vperm.xlu0 %307, %v297
  %v309 = vpop.permute.xlu0 %308
  %v311 = vperm.slane %v245, 5
  %v312 = vperm.slane %v246, 5
  %v313 = vmul.f32 %v309, %v311
  %v314 = vmul.f32 %v309, %v312
  %v315 = vadd.f32 %v305, %v313
  %v316 = vadd.f32 %v306, %v314
  %317 = vset.pattern.permute.xlu0 2
  %318 = vperm.xlu0 %317, %v297
  %v319 = vpop.permute.xlu0 %318
  %v321 = vperm.slane %v245, 6
  %v322 = vperm.slane %v246, 6
  %v323 = vmul.f32 %v319, %v321
  %v324 = vmul.f32 %v319, %v322
  %v325 = vadd.f32 %v315, %v323
  %v326 = vadd.f32 %v316, %v324
  %327 = vset.pattern.permute.xlu0 3
  %328 = vperm.xlu0 %327, %v297
  %v329 = vpop.permute.xlu0 %328
  %v331 = vperm.slane %v245, 7
  %v332 = vperm.slane %v246, 7
  %v333 = vmul.f32 %v329, %v331
  %v334 = vmul.f32 %v329, %v332
  %v335 = vadd.f32 %v325, %v333
  %v336 = vadd.f32 %v326, %v334
  %337 = vset.pattern.permute.xlu0 4
  %338 = vperm.xlu0 %337, %v297
  %v339 = vpop.permute.xlu0 %338
  %v341 = vadd.f32 %v335, %v339
  %v342 = vadd.f32 %v336, %v339
  %v343 = vmax.f32 %v341, 0.0
  %v344 = vmax.f32 %v342, 0.0
  %345 = vst [vmem:[%s4 + $0x10] sm:$0xff] %v343
  %346 = vst [vmem:[%s4 + $0x18] sm:$0xff] %v344
  // Predicated region
  $region18: #{dwsep_apply.1} parent=0 // pred_check
    _
  $region19: #{dwsep_apply.1} parent=0 // pred_check_branch
    %348 = sbr.rel (0) target = $region21
  $region20: #{dwsep_apply.1} parent=0 // pred_region
    _
  $region21: #{dwsep_apply.1} parent=0 // pred_fallthru
    _
  // Predicated region
  $region22: #{dwsep_apply.1} parent=0 // pred_check
    _
  $region23: #{dwsep_apply.1} parent=0 // pred_check_branch
    %350 = sbr.rel (0) target = $region25
  $region24: #{dwsep_apply.1} parent=0 // pred_region
    _
  $region25: #{dwsep_apply.1} parent=0 // pred_fallthru
    _

</llo_original>
